<compile_context>
chip_gen: v6e
topology: v6e:2x2x1
jax: 0.10.0
libtpu: 0.0.40
codegen_flags: <defaults>
</compile_context>

<pallas_src>
import math

import jax
import jax.numpy as jnp
from jax.experimental import pallas as pl
from jax.experimental.pallas import tpu as pltpu


# -----------------------------------------------------------------------------
# Parameter construction (glue, plain JAX) — Hamilton-product weight matrix of
# a QuaternionLinear layer.
# -----------------------------------------------------------------------------
def make_quaternion_weight(key, in_features, out_features):
    assert in_features % 4 == 0 and out_features % 4 == 0
    ri, oi = in_features // 4, out_features // 4
    kr, ki, kj, kk = jax.random.split(key, 4)
    s = 1.0 / math.sqrt(2.0 * (ri + oi))
    r = jax.random.uniform(kr, (ri, oi), jnp.float32, -s, s)
    i = jax.random.uniform(ki, (ri, oi), jnp.float32, -s, s)
    j = jax.random.uniform(kj, (ri, oi), jnp.float32, -s, s)
    k = jax.random.uniform(kk, (ri, oi), jnp.float32, -s, s)
    row_r = jnp.concatenate([r, -i, -j, -k], axis=1)
    row_i = jnp.concatenate([i,  r, -k,  j], axis=1)
    row_j = jnp.concatenate([j,  k,  r, -i], axis=1)
    row_k = jnp.concatenate([k, -j,  i,  r], axis=1)
    return jnp.concatenate([row_r, row_i, row_j, row_k], axis=0)  # (in, out)


# -----------------------------------------------------------------------------
# Pallas kernel: one batch block per grid step.
#   squeeze (mean over L) -> quat-linear1 + ReLU -> quat-linear2 + Sigmoid
#   -> channel-wise rescale of the resident x block.
# -----------------------------------------------------------------------------
def se_kernel(x_ref, w1_ref, b1_ref, w2_ref, b2_ref, o_ref):
    # x_ref : (1, C, L)   o_ref : (1, C, L)
    # w1_ref: (C, H)  b1_ref: (1, H)  w2_ref: (H, C)  b2_ref: (1, C)
    x = x_ref[...]
    xf = x.astype(jnp.float32)                      # f32 math (bf16-safe on v5e)

    # squeeze: adaptive avg pool over L (lane reduction)
    y = jnp.mean(xf, axis=-1)                       # (1, C)

    # excitation: tiny matmuls, computed once per batch block
    h = jnp.dot(y, w1_ref[...], preferred_element_type=jnp.float32) + b1_ref[...]
    h = jnp.maximum(h, 0.0)
    z = jnp.dot(h, w2_ref[...], preferred_element_type=jnp.float32) + b2_ref[...]
    s = 1.0 / (1.0 + jnp.exp(-z))                   # sigmoid, (1, C)

    # scale: broadcast over L (the lane dim)
    o_ref[...] = (xf * s[:, :, None]).astype(o_ref.dtype)


def se_layer(x, w1, b1, w2, b2):
    B, C, L = x.shape
    H = w1.shape[1]
    assert w1.shape == (C, H) and w2.shape == (H, C)

    # VMEM budgeting: in + out blocks (double buffered) + resident params.
    itemsize = jnp.dtype(x.dtype).itemsize
    block_bytes = C * L * itemsize
    param_bytes = (w1.size + b1.size + w2.size + b2.size) * 4
    needed = 4 * block_bytes + 2 * param_bytes + (4 << 20)   # + headroom
    vmem_limit = int(max(needed, 32 << 20))  # 32 MiB floor fits every gen's scoped VMEM
    # NOTE: for very large per-batch C*L slabs (> ~8 MiB) a C-tiled two-pass
    # variant would be needed on v7x (64 MiB physical VMEM).

    return pl.pallas_call(
        se_kernel,
        out_shape=jax.ShapeDtypeStruct((B, C, L), x.dtype),
        grid=(B,),
        in_specs=[
            # x: one batch slab per grid step (pipelined / double-buffered)
            pl.BlockSpec((1, C, L), lambda b: (b, 0, 0)),
            # excitation params: constant block index -> stay VMEM-resident
            pl.BlockSpec((C, H), lambda b: (0, 0)),
            pl.BlockSpec((1, H), lambda b: (0, 0)),
            pl.BlockSpec((H, C), lambda b: (0, 0)),
            pl.BlockSpec((1, C), lambda b: (0, 0)),
        ],
        out_specs=pl.BlockSpec((1, C, L), lambda b: (b, 0, 0)),
        compiler_params=pltpu.CompilerParams(
            dimension_semantics=("parallel",),   # megacore sharding on v7x
            vmem_limit_bytes=vmem_limit,
        ),
    )(x, w1, b1, w2, b2)


# -----------------------------------------------------------------------------
# Reference (plain JAX) for sanity checking
# -----------------------------------------------------------------------------
def se_layer_ref(x, w1, b1, w2, b2):
    y = jnp.mean(x, axis=-1)
    h = jnp.maximum(y @ w1 + b1, 0.0)
    s = jax.nn.sigmoid(h @ w2 + b2)
    return x * s[:, :, None]


if __name__ == "__main__":
    # channel divisible by reduction, both quaternion dims divisible by 4:
    # channel=64, reduction=16 -> hidden=4
    B, C, L = 2, 64, 16
    reduction = 16
    H = C // reduction

    key = jax.random.PRNGKey(0)
    kx, kw1, kw2 = jax.random.split(key, 3)

    x = jax.random.normal(kx, (B, C, L), jnp.float32)
    w1 = make_quaternion_weight(kw1, C, H)          # (C, H)
    b1 = jnp.zeros((1, H), jnp.float32)
    w2 = make_quaternion_weight(kw2, H, C)          # (H, C)
    b2 = jnp.zeros((1, C), jnp.float32)

    out = jax.block_until_ready(se_layer(x, w1, b1, w2, b2))
    ref = se_layer_ref(x, w1, b1, w2, b2)

    assert out.shape == (B, C, L)
    assert jnp.allclose(out, ref, atol=1e-5, rtol=1e-5)

    print("KERNEL_OK")
</pallas_src>

<mosaic_0001>
module attributes {stable_mosaic.version = 11 : i64} {
  func.func @se_kernel(%arg0: i32, %arg1: memref<1x64x16xf32, #tpu.memory_space<vmem>>, %arg2: memref<64x4xf32, #tpu.memory_space<vmem>>, %arg3: memref<1x4xf32, #tpu.memory_space<vmem>>, %arg4: memref<4x64xf32, #tpu.memory_space<vmem>>, %arg5: memref<1x64xf32, #tpu.memory_space<vmem>>, %arg6: memref<1x64x16xf32, #tpu.memory_space<vmem>>) attributes {dimension_semantics = [#tpu.dimension_semantics<parallel>], iteration_bounds = array<i64: 2>, scalar_prefetch = 0 : i64, scratch_operands = 0 : i64, tpu.core_type = #tpu.core_type<tc>, window_params = [{transform_indices = @transform_0, window_bounds = array<i64: 1, 64, 16>}, {pipeline_mode = #tpu.pipeline_mode<synchronous>, transform_indices = @transform_1, window_bounds = array<i64: 64, 4>}, {pipeline_mode = #tpu.pipeline_mode<synchronous>, transform_indices = @transform_2, window_bounds = array<i64: 1, 4>}, {pipeline_mode = #tpu.pipeline_mode<synchronous>, transform_indices = @transform_3, window_bounds = array<i64: 4, 64>}, {pipeline_mode = #tpu.pipeline_mode<synchronous>, transform_indices = @transform_4, window_bounds = array<i64: 1, 64>}, {transform_indices = @transform_5, window_bounds = array<i64: 1, 64, 16>}]} {
    %c0 = arith.constant 0 : index
    %c0_0 = arith.constant 0 : index
    %c0_1 = arith.constant 0 : index
    %0 = vector.load %arg1[%c0, %c0_0, %c0_1] : memref<1x64x16xf32, #tpu.memory_space<vmem>>, vector<1x64x16xf32>
    %cst = arith.constant dense<0.000000e+00> : vector<1x64xf32>
    %1 = vector.multi_reduction <add>, %0, %cst [2] : vector<1x64x16xf32> to vector<1x64xf32>
    %cst_2 = arith.constant 1.600000e+01 : f32
    %2 = vector.broadcast %cst_2 : f32 to vector<1x64xf32>
    %3 = arith.divf %1, %2 : vector<1x64xf32>
    %c0_3 = arith.constant 0 : index
    %c0_4 = arith.constant 0 : index
    %4 = vector.load %arg2[%c0_3, %c0_4] : memref<64x4xf32, #tpu.memory_space<vmem>>, vector<64x4xf32>
    %cst_5 = arith.constant dense<0.000000e+00> : vector<1x4xf32>
    %5 = tpu.matmul %3, %4, %cst_5 {dimension_numbers = #tpu.dot_dimension_numbers<[1], [0], [0], [1], [0, 0, 1, 1], [], []>} : vector<1x64xf32>, vector<64x4xf32>, vector<1x4xf32> -> vector<1x4xf32>
    %c0_6 = arith.constant 0 : index
    %c0_7 = arith.constant 0 : index
    %6 = vector.load %arg3[%c0_6, %c0_7] : memref<1x4xf32, #tpu.memory_space<vmem>>, vector<1x4xf32>
    %7 = arith.addf %5, %6 : vector<1x4xf32>
    %cst_8 = arith.constant 0.000000e+00 : f32
    %8 = vector.broadcast %cst_8 : f32 to vector<1x4xf32>
    %9 = arith.maximumf %7, %8 : vector<1x4xf32>
    %c0_9 = arith.constant 0 : index
    %c0_10 = arith.constant 0 : index
    %10 = vector.load %arg4[%c0_9, %c0_10] : memref<4x64xf32, #tpu.memory_space<vmem>>, vector<4x64xf32>
    %cst_11 = arith.constant dense<0.000000e+00> : vector<1x64xf32>
    %11 = tpu.matmul %9, %10, %cst_11 {dimension_numbers = #tpu.dot_dimension_numbers<[1], [0], [0], [1], [0, 0, 1, 1], [], []>} : vector<1x4xf32>, vector<4x64xf32>, vector<1x64xf32> -> vector<1x64xf32>
    %c0_12 = arith.constant 0 : index
    %c0_13 = arith.constant 0 : index
    %12 = vector.load %arg5[%c0_12, %c0_13] : memref<1x64xf32, #tpu.memory_space<vmem>>, vector<1x64xf32>
    %13 = arith.addf %11, %12 : vector<1x64xf32>
    %cst_14 = arith.constant 0.000000e+00 : f32
    %14 = vector.broadcast %cst_14 : f32 to vector<1x64xf32>
    %15 = arith.subf %14, %13 : vector<1x64xf32>
    %16 = math.exp %15 : vector<1x64xf32>
    %cst_15 = arith.constant 1.000000e+00 : f32
    %17 = vector.broadcast %cst_15 : f32 to vector<1x64xf32>
    %18 = arith.addf %17, %16 : vector<1x64xf32>
    %cst_16 = arith.constant 1.000000e+00 : f32
    %19 = vector.broadcast %cst_16 : f32 to vector<1x64xf32>
    %20 = arith.divf %19, %18 : vector<1x64xf32>
    %21 = vector.shape_cast %20 : vector<1x64xf32> to vector<1x64x1xf32>
    %22 = vector.broadcast %21 : vector<1x64x1xf32> to vector<1x64x16xf32>
    %23 = arith.mulf %0, %22 : vector<1x64x16xf32>
    %c0_17 = arith.constant 0 : index
    %c0_18 = arith.constant 0 : index
    %c0_19 = arith.constant 0 : index
    %24 = vector.load %arg6[%c0_17, %c0_18, %c0_19] : memref<1x64x16xf32, #tpu.memory_space<vmem>>, vector<1x64x16xf32>
    tpu.vector_store %arg6[%c0_17, %c0_18, %c0_19], %23 {strides = array<i32>} : memref<1x64x16xf32, #tpu.memory_space<vmem>>, vector<1x64x16xf32>,
    return
  }
  func.func @transform_0(%arg0: i32) -> (i32, i32, i32) {
    %c0_i32 = arith.constant 0 : i32
    %c0_i32_0 = arith.constant 0 : i32
    %c0_i32_1 = arith.constant 0 : i32
    return %arg0, %c0_i32, %c0_i32_0 : i32, i32, i32
  }
  func.func @transform_1(%arg0: i32) -> (i32, i32) {
    %c0_i32 = arith.constant 0 : i32
    %c0_i32_0 = arith.constant 0 : i32
    %c0_i32_1 = arith.constant 0 : i32
    return %c0_i32, %c0_i32_0 : i32, i32
  }
  func.func @transform_2(%arg0: i32) -> (i32, i32) {
    %c0_i32 = arith.constant 0 : i32
    %c0_i32_0 = arith.constant 0 : i32
    %c0_i32_1 = arith.constant 0 : i32
    return %c0_i32, %c0_i32_0 : i32, i32
  }
  func.func @transform_3(%arg0: i32) -> (i32, i32) {
    %c0_i32 = arith.constant 0 : i32
    %c0_i32_0 = arith.constant 0 : i32
    %c0_i32_1 = arith.constant 0 : i32
    return %c0_i32, %c0_i32_0 : i32, i32
  }
  func.func @transform_4(%arg0: i32) -> (i32, i32) {
    %c0_i32 = arith.constant 0 : i32
    %c0_i32_0 = arith.constant 0 : i32
    %c0_i32_1 = arith.constant 0 : i32
    return %c0_i32, %c0_i32_0 : i32, i32
  }
  func.func @transform_5(%arg0: i32) -> (i32, i32, i32) {
    %c0_i32 = arith.constant 0 : i32
    %c0_i32_0 = arith.constant 0 : i32
    %c0_i32_1 = arith.constant 0 : i32
    return %arg0, %c0_i32, %c0_i32_0 : i32, i32, i32
  }
}

</mosaic_0001>

<llo_original>
// kernel: tpu_custom_call.1
$region0: #{tpu_custom_call.1}
  #allocation0 [shape = 'u32[]', space=smem, size = 0x4, offset = 0x4, fixed_abs, tag = 'smem constant byte address 0x4 - core index']
  #allocation1 [shape = 'u32[144,128]{1,0:T(1,128)}', space=vmem, size = 0x12000, scoped, tag = 'internal scratch']
  %s0 = inlined_call_operand.vmem [shape: f32[2,64,16], index: 0, kind: input, shape index: {}]
  %s1 = inlined_call_operand.vmem [shape: f32[64,4], index: 1, kind: input, shape index: {}]
  %s2 = inlined_call_operand.vmem [shape: f32[1,4], index: 2, kind: input, shape index: {}]
  %s3 = inlined_call_operand.vmem [shape: f32[4,64], index: 3, kind: input, shape index: {}]
  %s4 = inlined_call_operand.vmem [shape: f32[1,64], index: 4, kind: input, shape index: {}]
  %s5 = inlined_call_operand.vmem [shape: f32[2,64,16], index: 5, kind: output, shape index: {}]
  %s6 = sld [smem:[#allocation0]]
  $region53: #{tpu_custom_call.1} parent=0
    _
  %s8 = ssub.s32 1, %s6
  %s9 = scalar_select 0, %s8, %s6
  loop: start=0, step=1, limit=4
  $region2: #{tpu_custom_call.1} parent=0 // loop_pre_header
    _
  $region3: #{tpu_custom_call.1} parent=0 // loop_header
    %s11 = sphi 0, %s15
    %p12 = scmp.ge.s32.totalorder %s11, 4
    %s21 = sphi 0, %s23
    %s24 = sphi 0, %s21
    %s25 = sphi 0, %s24
    %s41 = sphi 0, %s25
    %s45 = sphi 0, %s45
    %s47 = sphi 0, %s45
    %s48 = sphi 0, %s47
    %s62 = sphi 0, %s48
    %s66 = sphi 0, %s66
    %s68 = sphi 0, %s66
    %s69 = sphi 0, %s68
    %s83 = sphi 0, %s69
    %s87 = sphi 0, %s87
    %s89 = sphi 0, %s87
    %s90 = sphi 0, %s89
    %s104 = sphi 0, %s90
    %s108 = sphi 0, %s108
    %s110 = sphi 0, %s108
    %s111 = sphi 0, %s110
    %s125 = sphi 0, %s111
    %s131 = sphi 0, %s133
    %s134 = sphi 0, %s131
    %s135 = sphi 0, %s134
    %s151 = sphi 0, %s135
  $region4: #{tpu_custom_call.1} parent=0 // loop_header_branch
    %14 = sbr.rel (%p12) target = $region8
  $region5: #{tpu_custom_call.1} parent=0 // loop_body
    %s16 = ssub.s32 %s11, 1
    %s17 = ssub.s32 %s11, 2
    %s18 = sadd.s32 %s11, 1
    %s19 = ssub.s32 %s11, %s18
    %p20 = scmp.eq.s32.totalorder %s19, 0
    %s22 = sadd.s32 %s21, 1
    %s23 = scalar_select %p20, %s21, %s22
    %p26 = pneg %p20
    %p27 = scmp.eq.s32.totalorder %s11, 1
    %p28 = por %p26, %p27
    %p29 = scmp.ne.s32.totalorder %s21, %s24
    %p30 = scmp.eq.s32.totalorder %s11, 0
    %p31 = por %p29, %p30
    %p32 = scmp.ne.s32.totalorder %s21, %s24
    %p33 = scmp.eq.s32.totalorder %s16, 1
    %p34 = por %p32, %p33
    %p35 = scmp.ne.s32.totalorder %s24, %s25
    %p36 = scmp.eq.s32.totalorder %s16, 0
    %p37 = por %p35, %p36
    %p38 = scmp.ne.s32.totalorder %s24, %s25
    %p39 = scmp.eq.s32.totalorder %s17, 1
    %p40 = por %p38, %p39
    %p42 = scmp.ne.s32.totalorder %s25, %s41
    %p43 = scmp.eq.s32.totalorder %s17, 0
    %p44 = por %p42, %p43
    %s46 = sadd.s32 %s45, 1
    %p49 = scmp.eq.s32.totalorder %s11, 1
    %p50 = scmp.ne.s32.totalorder %s45, %s47
    %p51 = scmp.eq.s32.totalorder %s11, 0
    %p52 = por %p50, %p51
    %p53 = scmp.ne.s32.totalorder %s45, %s47
    %p54 = scmp.eq.s32.totalorder %s16, 1
    %p55 = por %p53, %p54
    %p56 = scmp.ne.s32.totalorder %s47, %s48
    %p57 = scmp.eq.s32.totalorder %s16, 0
    %p58 = por %p56, %p57
    %p59 = scmp.ne.s32.totalorder %s47, %s48
    %p60 = scmp.eq.s32.totalorder %s17, 1
    %p61 = por %p59, %p60
    %p63 = scmp.ne.s32.totalorder %s48, %s62
    %p64 = scmp.eq.s32.totalorder %s17, 0
    %p65 = por %p63, %p64
    %s67 = sadd.s32 %s66, 1
    %p70 = scmp.eq.s32.totalorder %s11, 1
    %p71 = scmp.ne.s32.totalorder %s66, %s68
    %p72 = scmp.eq.s32.totalorder %s11, 0
    %p73 = por %p71, %p72
    %p74 = scmp.ne.s32.totalorder %s66, %s68
    %p75 = scmp.eq.s32.totalorder %s16, 1
    %p76 = por %p74, %p75
    %p77 = scmp.ne.s32.totalorder %s68, %s69
    %p78 = scmp.eq.s32.totalorder %s16, 0
    %p79 = por %p77, %p78
    %p80 = scmp.ne.s32.totalorder %s68, %s69
    %p81 = scmp.eq.s32.totalorder %s17, 1
    %p82 = por %p80, %p81
    %p84 = scmp.ne.s32.totalorder %s69, %s83
    %p85 = scmp.eq.s32.totalorder %s17, 0
    %p86 = por %p84, %p85
    %s88 = sadd.s32 %s87, 1
    %p91 = scmp.eq.s32.totalorder %s11, 1
    %p92 = scmp.ne.s32.totalorder %s87, %s89
    %p93 = scmp.eq.s32.totalorder %s11, 0
    %p94 = por %p92, %p93
    %p95 = scmp.ne.s32.totalorder %s87, %s89
    %p96 = scmp.eq.s32.totalorder %s16, 1
    %p97 = por %p95, %p96
    %p98 = scmp.ne.s32.totalorder %s89, %s90
    %p99 = scmp.eq.s32.totalorder %s16, 0
    %p100 = por %p98, %p99
    %p101 = scmp.ne.s32.totalorder %s89, %s90
    %p102 = scmp.eq.s32.totalorder %s17, 1
    %p103 = por %p101, %p102
    %p105 = scmp.ne.s32.totalorder %s90, %s104
    %p106 = scmp.eq.s32.totalorder %s17, 0
    %p107 = por %p105, %p106
    %s109 = sadd.s32 %s108, 1
    %p112 = scmp.eq.s32.totalorder %s11, 1
    %p113 = scmp.ne.s32.totalorder %s108, %s110
    %p114 = scmp.eq.s32.totalorder %s11, 0
    %p115 = por %p113, %p114
    %p116 = scmp.ne.s32.totalorder %s108, %s110
    %p117 = scmp.eq.s32.totalorder %s16, 1
    %p118 = por %p116, %p117
    %p119 = scmp.ne.s32.totalorder %s110, %s111
    %p120 = scmp.eq.s32.totalorder %s16, 0
    %p121 = por %p119, %p120
    %p122 = scmp.ne.s32.totalorder %s110, %s111
    %p123 = scmp.eq.s32.totalorder %s17, 1
    %p124 = por %p122, %p123
    %p126 = scmp.ne.s32.totalorder %s111, %s125
    %p127 = scmp.eq.s32.totalorder %s17, 0
    %p128 = por %p126, %p127
    %s129 = ssub.s32 %s11, %s18
    %p130 = scmp.eq.s32.totalorder %s129, 0
    %s132 = sadd.s32 %s131, 1
    %s133 = scalar_select %p130, %s131, %s132
    %p136 = pneg %p130
    %p137 = scmp.eq.s32.totalorder %s11, 1
    %p138 = por %p136, %p137
    %p139 = scmp.ne.s32.totalorder %s131, %s134
    %p140 = scmp.eq.s32.totalorder %s11, 0
    %p141 = por %p139, %p140
    %p142 = scmp.ne.s32.totalorder %s131, %s134
    %p143 = scmp.eq.s32.totalorder %s16, 1
    %p144 = por %p142, %p143
    %p145 = scmp.ne.s32.totalorder %s134, %s135
    %p146 = scmp.eq.s32.totalorder %s16, 0
    %p147 = por %p145, %p146
    %p148 = scmp.ne.s32.totalorder %s134, %s135
    %p149 = scmp.eq.s32.totalorder %s17, 1
    %p150 = por %p148, %p149
    %p152 = scmp.ne.s32.totalorder %s135, %s151
    %p153 = scmp.eq.s32.totalorder %s17, 0
    %p154 = por %p152, %p153
    %p155 = scmp.le.s32.totalorder 1, %s11
    %p156 = scmp.lt.s32.totalorder %s11, 3
    %p157 = pnand %p155, %p156
    %p158 = pneg %p157
    // Predicated region
    $region9: #{tpu_custom_call.1} parent=5 // pred_check
      _
    $region10: #{tpu_custom_call.1} parent=5 // pred_check_branch
      %160 = sbr.rel (%p157) target = $region12
    $region11: #{tpu_custom_call.1} parent=5 // pred_region
      %s161 = ssub.s32 %s11, 1
      // Predicated region
      $region13: #{tpu_custom_call.1} parent=11 // pred_check
        %p162 = pneg %p58
      $region14: #{tpu_custom_call.1} parent=11 // pred_check_branch
        %164 = sbr.rel (%p162) target = $region16
      $region15: #{tpu_custom_call.1} parent=11 // pred_region
        _
      $region16: #{tpu_custom_call.1} parent=11 // pred_fallthru
        _
      // Predicated region
      $region17: #{tpu_custom_call.1} parent=11 // pred_check
        %p165 = pneg %p79
      $region18: #{tpu_custom_call.1} parent=11 // pred_check_branch
        %167 = sbr.rel (%p165) target = $region20
      $region19: #{tpu_custom_call.1} parent=11 // pred_region
        _
      $region20: #{tpu_custom_call.1} parent=11 // pred_fallthru
        _
      // Predicated region
      $region21: #{tpu_custom_call.1} parent=11 // pred_check
        %p168 = pneg %p100
      $region22: #{tpu_custom_call.1} parent=11 // pred_check_branch
        %170 = sbr.rel (%p168) target = $region24
      $region23: #{tpu_custom_call.1} parent=11 // pred_region
        _
      $region24: #{tpu_custom_call.1} parent=11 // pred_fallthru
        _
      // Predicated region
      $region25: #{tpu_custom_call.1} parent=11 // pred_check
        %p171 = pneg %p121
      $region26: #{tpu_custom_call.1} parent=11 // pred_check_branch
        %173 = sbr.rel (%p171) target = $region28
      $region27: #{tpu_custom_call.1} parent=11 // pred_region
        _
      $region28: #{tpu_custom_call.1} parent=11 // pred_fallthru
        _
    $region12: #{tpu_custom_call.1} parent=5 // pred_fallthru
      _
    %p174 = scmp.lt.s32.totalorder %s11, 2
    // Predicated region
    $region29: #{tpu_custom_call.1} parent=5 // pred_check
      %p175 = pneg %p174
    $region30: #{tpu_custom_call.1} parent=5 // pred_check_branch
      %177 = sbr.rel (%p175) target = $region32
    $region31: #{tpu_custom_call.1} parent=5 // pred_region
      // Predicated region
      $region33: #{tpu_custom_call.1} parent=31 // pred_check
        %p178 = pneg %p31
      $region34: #{tpu_custom_call.1} parent=31 // pred_check_branch
        %180 = sbr.rel (%p178) target = $region36
      $region35: #{tpu_custom_call.1} parent=31 // pred_region
        %p181 = scmp.lt.s32.totalorder %s11, 1
        %s182 = scalar_select %p181, %s11, 1
        %s183 = smul.addr %s182, 8
        %s184 = smul.addr %s183, 8
        %s185 = scalar_lea.vmem %s0, %s184
      $region36: #{tpu_custom_call.1} parent=31 // pred_fallthru
        _
    $region32: #{tpu_custom_call.1} parent=5 // pred_fallthru
      _
    %p186 = scmp.le.s32.totalorder 1, %s11
    %p187 = scmp.lt.s32.totalorder %s11, 3
    %p188 = pnand %p186, %p187
    %p189 = pneg %p188
    // Predicated region
    $region37: #{tpu_custom_call.1} parent=5 // pred_check
      _
    $region38: #{tpu_custom_call.1} parent=5 // pred_check_branch
      %191 = sbr.rel (%p188) target = $region40
    $region39: #{tpu_custom_call.1} parent=5 // pred_region
      %s192 = ssub.s32 %s11, 1
      %p193 = scmp.lt.s32.totalorder %s16, 1
      %s194 = scalar_select %p193, %s16, 1
      %s195 = smul.addr %s194, 8
      %s196 = smul.addr %s195, 8
      %s197 = scalar_lea.vmem %s0, %s196
      %p198 = pneg %p37
      %p199 = pneg %p34
      %p200 = pneg %p58
      %p201 = pneg %p55
      %p202 = pneg %p79
      %p203 = pneg %p76
      %p204 = pneg %p100
      %p205 = pneg %p97
      %p206 = pneg %p121
      %p207 = pneg %p118
      %p208 = pneg %p147
      %p209 = pneg %p144
      %p210 = scmp.lt.s32.totalorder %s16, 1
      %s211 = scalar_select %p210, %s16, 1
      %s212 = smul.addr %s211, 8
      %s213 = smul.addr %s212, 8
      %s214 = scalar_lea.vmem %s5, %s213
      %p215 = scmp.lt.s32.totalorder %s16, 1
      %s216 = scalar_select %p215, %s16, 1
      %s217 = smul.addr %s216, 8
      %s218 = smul.addr %s217, 8
      %s219 = scalar_lea.vmem %s0, %s218
      %p220 = scmp.lt.s32.totalorder %s16, 1
      %s221 = scalar_select %p220, %s16, 1
      %s222 = smul.addr %s221, 8
      %s223 = smul.addr %s222, 8
      %s224 = scalar_lea.vmem %s5, %s223
      %v225 = vld [vmem:[%s219] sm:$0xff]
      %v226 = vld [vmem:[%s219 + $0x8] sm:$0xff]
      %v227 = vld [vmem:[%s219 + $0x10] sm:$0xff]
      %v228 = vld [vmem:[%s219 + $0x18] sm:$0xff]
      %v229 = vld [vmem:[%s219 + $0x20] sm:$0xff]
      %v230 = vld [vmem:[%s219 + $0x28] sm:$0xff]
      %v231 = vld [vmem:[%s219 + $0x30] sm:$0xff]
      %v232 = vld [vmem:[%s219 + $0x38] sm:$0xff]
      %vm233 = vcmask 130048
      %v234 = vsel %vm233, %v225, 0.0
      %235 = vadd.xlane.f32.xlu0 %v234
      %v236 = vpop.xlane.xlu0 %235
      %v237 = vsel %vm233, %v226, 0.0
      %238 = vadd.xlane.f32.xlu0 %v237
      %v239 = vpop.xlane.xlu0 %238
      %v240 = vsel %vm233, %v227, 0.0
      %241 = vadd.xlane.f32.xlu0 %v240
      %v242 = vpop.xlane.xlu0 %241
      %v243 = vsel %vm233, %v228, 0.0
      %244 = vadd.xlane.f32.xlu0 %v243
      %v245 = vpop.xlane.xlu0 %244
      %v246 = vsel %vm233, %v229, 0.0
      %247 = vadd.xlane.f32.xlu0 %v246
      %v248 = vpop.xlane.xlu0 %247
      %v249 = vsel %vm233, %v230, 0.0
      %250 = vadd.xlane.f32.xlu0 %v249
      %v251 = vpop.xlane.xlu0 %250
      %v252 = vsel %vm233, %v231, 0.0
      %253 = vadd.xlane.f32.xlu0 %v252
      %v254 = vpop.xlane.xlu0 %253
      %v255 = vsel %vm233, %v232, 0.0
      %256 = vadd.xlane.f32.xlu0 %v255
      %v257 = vpop.xlane.xlu0 %256
      %v258 = vrcp.pop 16.0
      %v259 = vmul.f32 %v236, %v258
      %v260 = vmul.f32 %v239, %v258
      %v261 = vmul.f32 %v242, %v258
      %v262 = vmul.f32 %v245, %v258
      %v263 = vmul.f32 %v248, %v258
      %v264 = vmul.f32 %v251, %v258
      %v265 = vmul.f32 %v254, %v258
      %v266 = vmul.f32 %v257, %v258
      %v267 = vld [vmem:[%s1] sm:$0xff]
      %v268 = vld [vmem:[%s1 + $0x8] sm:$0xff]
      %v269 = vld [vmem:[%s1 + $0x10] sm:$0xff]
      %v270 = vld [vmem:[%s1 + $0x18] sm:$0xff]
      %v271 = vld [vmem:[%s1 + $0x20] sm:$0xff]
      %v272 = vld [vmem:[%s1 + $0x28] sm:$0xff]
      %v273 = vld [vmem:[%s1 + $0x30] sm:$0xff]
      %v274 = vld [vmem:[%s1 + $0x38] sm:$0xff]
      %v275 = vld [vmem:[%s2] sm:$0x1]
      %v284 = vlaneseq
      %v285 = vand.u32 %v284, 127
      %v286 = vlaneseq
      %v287 = vshrl.u32 %v286, 7
      %v288 = vsub.s32 %v285, %v287
      %v289 = vrot.slane %v259, %v288
      %v290 = vadd.s32 %v285, 4294967288
      %v291 = vlaneseq
      %v292 = vshrl.u32 %v291, 7
      %v293 = vsub.s32 %v290, %v292
      %v294 = vrot.slane %v260, %v293
      %vm295 = vcmask 130112
      %v296 = vsel %vm295, %v294, %v289
      %v297 = vadd.s32 %v285, 4294967280
      %v298 = vlaneseq
      %v299 = vshrl.u32 %v298, 7
      %v300 = vsub.s32 %v297, %v299
      %v301 = vrot.slane %v261, %v300
      %vm302 = vcmask 195712
      %v303 = vsel %vm302, %v301, %v296
      %v304 = vadd.s32 %v285, 4294967272
      %v305 = vlaneseq
      %v306 = vshrl.u32 %v305, 7
      %v307 = vsub.s32 %v304, %v306
      %v308 = vrot.slane %v262, %v307
      %vm309 = vcmask 261312
      %v310 = vsel %vm309, %v308, %v303
      %v311 = vadd.s32 %v285, 4294967264
      %v312 = vlaneseq
      %v313 = vshrl.u32 %v312, 7
      %v314 = vsub.s32 %v311, %v313
      %v315 = vrot.slane %v263, %v314
      %vm316 = vcmask 326912
      %v317 = vsel %vm316, %v315, %v310
      %v318 = vadd.s32 %v285, 4294967256
      %v319 = vlaneseq
      %v320 = vshrl.u32 %v319, 7
      %v321 = vsub.s32 %v318, %v320
      %v322 = vrot.slane %v264, %v321
      %vm323 = vcmask 392512
      %v324 = vsel %vm323, %v322, %v317
      %v325 = vadd.s32 %v285, 4294967248
      %v326 = vlaneseq
      %v327 = vshrl.u32 %v326, 7
      %v328 = vsub.s32 %v325, %v327
      %v329 = vrot.slane %v265, %v328
      %vm330 = vcmask 458112
      %v331 = vsel %vm330, %v329, %v324
      %v332 = vadd.s32 %v285, 4294967240
      %v333 = vlaneseq
      %v334 = vshrl.u32 %v333, 7
      %v335 = vsub.s32 %v332, %v334
      %v336 = vrot.slane %v266, %v335
      %vm337 = vcmask 523712
      %v338 = vsel %vm337, %v336, %v331
      %vm339 = vcmask 523264
      %v340 = vsel %vm339, %v338, 0
      %342 = vmatprep.subr.mxu0 0.0
      %343 = vmatpush1.msra.mxu0 0.0
      %344 = vmatprep.subr.mxu0 0.0
      %345 = vmatpush1.msra.mxu0 0.0
      %346 = vmatprep.subr.mxu0 0.0
      %347 = vmatpush1.msra.mxu0 0.0
      %348 = vmatprep.subr.mxu0 0.0
      %349 = vmatpush1.msra.mxu0 0.0
      %350 = vmatprep.subr.mxu0 0.0
      %351 = vmatpush1.msra.mxu0 0.0
      %352 = vmatprep.subr.mxu0 0.0
      %353 = vmatpush1.msra.mxu0 0.0
      %354 = vmatprep.subr.mxu0 0.0
      %355 = vmatpush1.msra.mxu0 0.0
      %356 = vmatprep.subr.mxu0 0.0
      %357 = vmatpush1.msra.mxu0 0.0
      %358 = vmatprep.subr.mxu0 0.0
      %359 = vmatpush1.msra.mxu0 %v274
      %360 = vmatprep.subr.mxu0 0.0
      %361 = vmatpush1.msra.mxu0 %v273
      %362 = vmatprep.subr.mxu0 0.0
      %363 = vmatpush1.msra.mxu0 %v272
      %364 = vmatprep.subr.mxu0 0.0
      %365 = vmatpush1.msra.mxu0 %v271
      %366 = vmatprep.subr.mxu0 0.0
      %367 = vmatpush1.msra.mxu0 %v270
      %368 = vmatprep.subr.mxu0 0.0
      %369 = vmatpush1.msra.mxu0 %v269
      %370 = vmatprep.subr.mxu0 0.0
      %371 = vmatpush1.msra.mxu0 %v268
      %372 = vmatprep.subr.mxu0 0.0
      %373 = vmatpush1.msra.mxu0 %v267
      %374 = vmatprep.subr.mxu0 0.0
      %375 = vmatpush2.msra.mxu0 0.0
      %376 = vmatprep.subr.mxu0 0.0
      %377 = vmatpush2.msra.mxu0 0.0
      %378 = vmatprep.subr.mxu0 0.0
      %379 = vmatpush2.msra.mxu0 0.0
      %380 = vmatprep.subr.mxu0 0.0
      %381 = vmatpush2.msra.mxu0 0.0
      %382 = vmatprep.subr.mxu0 0.0
      %383 = vmatpush2.msra.mxu0 0.0
      %384 = vmatprep.subr.mxu0 0.0
      %385 = vmatpush2.msra.mxu0 0.0
      %386 = vmatprep.subr.mxu0 0.0
      %387 = vmatpush2.msra.mxu0 0.0
      %388 = vmatprep.subr.mxu0 0.0
      %389 = vmatpush2.msra.mxu0 0.0
      %390 = vmatprep.subr.mxu0 0.0
      %391 = vmatpush2.msra.mxu0 0.0
      %392 = vmatprep.subr.mxu0 0.0
      %393 = vmatpush2.msra.mxu0 0.0
      %394 = vmatprep.subr.mxu0 0.0
      %395 = vmatpush2.msra.mxu0 0.0
      %396 = vmatprep.subr.mxu0 0.0
      %397 = vmatpush2.msra.mxu0 0.0
      %398 = vmatprep.subr.mxu0 0.0
      %399 = vmatpush2.msra.mxu0 0.0
      %400 = vmatprep.subr.mxu0 0.0
      %401 = vmatpush2.msra.mxu0 0.0
      %402 = vmatprep.subr.mxu0 0.0
      %403 = vmatpush2.msra.mxu0 0.0
      %404 = vmatprep.subr.mxu0 0.0
      %405 = vmatpush2.msra.mxu0 0.0
      %406 = vmatprep.mubr.f32.mxu0 0.0
      %407 = vmatmul.mubr.f32.gmra.mxu0 %v340
      %v408 = vpop.f32.mrf.mxu0
      %v409 = vadd.f32 %v275, %v408
      %v410 = vpop.f32.mrf.mxu0
      %411 = vdwg.mxu0
      %v412 = vmax.f32 %v409, 0.0
      %v413 = vld [vmem:[%s3] sm:$0xf]
      %v414 = vld [vmem:[%s4] sm:$0x1]
      %vm415 = vcmask 31744
      %v417 = vsel %vm415, %v412, 0
      %vm419 = vcmask 1043456
      %v421 = vsel %vm419, %v413, 0
      %423 = vmatprep.subr.mxu0 0.0
      %424 = vmatpush1.msra.mxu0 0.0
      %425 = vmatprep.subr.mxu0 0.0
      %426 = vmatpush1.msra.mxu0 0.0
      %427 = vmatprep.subr.mxu0 0.0
      %428 = vmatpush1.msra.mxu0 0.0
      %429 = vmatprep.subr.mxu0 0.0
      %430 = vmatpush1.msra.mxu0 0.0
      %431 = vmatprep.subr.mxu0 0.0
      %432 = vmatpush1.msra.mxu0 0.0
      %433 = vmatprep.subr.mxu0 0.0
      %434 = vmatpush1.msra.mxu0 0.0
      %435 = vmatprep.subr.mxu0 0.0
      %436 = vmatpush1.msra.mxu0 0.0
      %437 = vmatprep.subr.mxu0 0.0
      %438 = vmatpush1.msra.mxu0 0.0
      %439 = vmatprep.subr.mxu0 0.0
      %440 = vmatpush1.msra.mxu0 0.0
      %441 = vmatprep.subr.mxu0 0.0
      %442 = vmatpush1.msra.mxu0 0.0
      %443 = vmatprep.subr.mxu0 0.0
      %444 = vmatpush1.msra.mxu0 0.0
      %445 = vmatprep.subr.mxu0 0.0
      %446 = vmatpush1.msra.mxu0 0.0
      %447 = vmatprep.subr.mxu0 0.0
      %448 = vmatpush1.msra.mxu0 0.0
      %449 = vmatprep.subr.mxu0 0.0
      %450 = vmatpush1.msra.mxu0 0.0
      %451 = vmatprep.subr.mxu0 0.0
      %452 = vmatpush1.msra.mxu0 0.0
      %453 = vmatprep.subr.mxu0 0.0
      %454 = vmatpush1.msra.mxu0 %v421
      %455 = vmatprep.subr.mxu0 0.0
      %456 = vmatpush2.msra.mxu0 0.0
      %457 = vmatprep.subr.mxu0 0.0
      %458 = vmatpush2.msra.mxu0 0.0
      %459 = vmatprep.subr.mxu0 0.0
      %460 = vmatpush2.msra.mxu0 0.0
      %461 = vmatprep.subr.mxu0 0.0
      %462 = vmatpush2.msra.mxu0 0.0
      %463 = vmatprep.subr.mxu0 0.0
      %464 = vmatpush2.msra.mxu0 0.0
      %465 = vmatprep.subr.mxu0 0.0
      %466 = vmatpush2.msra.mxu0 0.0
      %467 = vmatprep.subr.mxu0 0.0
      %468 = vmatpush2.msra.mxu0 0.0
      %469 = vmatprep.subr.mxu0 0.0
      %470 = vmatpush2.msra.mxu0 0.0
      %471 = vmatprep.subr.mxu0 0.0
      %472 = vmatpush2.msra.mxu0 0.0
      %473 = vmatprep.subr.mxu0 0.0
      %474 = vmatpush2.msra.mxu0 0.0
      %475 = vmatprep.subr.mxu0 0.0
      %476 = vmatpush2.msra.mxu0 0.0
      %477 = vmatprep.subr.mxu0 0.0
      %478 = vmatpush2.msra.mxu0 0.0
      %479 = vmatprep.subr.mxu0 0.0
      %480 = vmatpush2.msra.mxu0 0.0
      %481 = vmatprep.subr.mxu0 0.0
      %482 = vmatpush2.msra.mxu0 0.0
      %483 = vmatprep.subr.mxu0 0.0
      %484 = vmatpush2.msra.mxu0 0.0
      %485 = vmatprep.subr.mxu0 0.0
      %486 = vmatpush2.msra.mxu0 0.0
      %487 = vmatprep.mubr.f32.mxu0 0.0
      %488 = vmatmul.mubr.f32.gmra.mxu0 %v417
      %v489 = vpop.f32.mrf.mxu0
      %v490 = vadd.f32 %v414, %v489
      %v491 = vpop.f32.mrf.mxu0
      %492 = vdwg.mxu0
      %v493 = vsub.f32 0.0, %v490
      %v494 = vmul.f32 %v493, 1.442695
      %v495 = vpow.pop %v494
      %v496 = vadd.f32 %v495, 1.0
      %v497 = vrcp.pop %v496
      %v498 = vmul.f32 1.0, %v497
      %v499 = vlaneseq
      %v500 = vshrl.u32 %v499, 7
      %v501 = vsub.s32 0, %v500
      %v502 = vrot.slane %v498, %v501
      %504 = vbcast.lane.b32.xlu0 %v502, 256
      %v505 = vpop.permute.xlu0 %504
      %s507 = sor.u32 256, 8
      %508 = vbcast.lane.b32.xlu0 %v502, %s507
      %v509 = vpop.permute.xlu0 %508
      %s511 = sor.u32 256, 16
      %512 = vbcast.lane.b32.xlu0 %v502, %s511
      %v513 = vpop.permute.xlu0 %512
      %s515 = sor.u32 256, 24
      %516 = vbcast.lane.b32.xlu0 %v502, %s515
      %v517 = vpop.permute.xlu0 %516
      %s519 = sor.u32 256, 32
      %520 = vbcast.lane.b32.xlu0 %v502, %s519
      %v521 = vpop.permute.xlu0 %520
      %s523 = sor.u32 256, 40
      %524 = vbcast.lane.b32.xlu0 %v502, %s523
      %v525 = vpop.permute.xlu0 %524
      %s527 = sor.u32 256, 48
      %528 = vbcast.lane.b32.xlu0 %v502, %s527
      %v529 = vpop.permute.xlu0 %528
      %s531 = sor.u32 256, 56
      %532 = vbcast.lane.b32.xlu0 %v502, %s531
      %v533 = vpop.permute.xlu0 %532
      %v534 = vmul.f32 %v225, %v505
      %v535 = vmul.f32 %v226, %v509
      %v536 = vmul.f32 %v227, %v513
      %v537 = vmul.f32 %v228, %v517
      %v538 = vmul.f32 %v229, %v521
      %v539 = vmul.f32 %v230, %v525
      %v540 = vmul.f32 %v231, %v529
      %v541 = vmul.f32 %v232, %v533
      %542 = vst.msk [vmem:[%s224] sm:$0xff] %vm233, %v534
      %543 = vst.msk [vmem:[%s224 + $0x8] sm:$0xff] %vm233, %v535
      %544 = vst.msk [vmem:[%s224 + $0x10] sm:$0xff] %vm233, %v536
      %545 = vst.msk [vmem:[%s224 + $0x18] sm:$0xff] %vm233, %v537
      %546 = vst.msk [vmem:[%s224 + $0x20] sm:$0xff] %vm233, %v538
      %547 = vst.msk [vmem:[%s224 + $0x28] sm:$0xff] %vm233, %v539
      %548 = vst.msk [vmem:[%s224 + $0x30] sm:$0xff] %vm233, %v540
      %549 = vst.msk [vmem:[%s224 + $0x38] sm:$0xff] %vm233, %v541
      %p550 = scmp.lt.s32.totalorder %s16, 1
      %s551 = scalar_select %p550, %s16, 1
      %s552 = smul.addr %s551, 8
      %s553 = smul.addr %s552, 8
      %s554 = scalar_lea.vmem %s5, %s553
      // Predicated region
      $region41: #{tpu_custom_call.1} parent=39 // pred_check
        %p555 = pneg %p144
      $region42: #{tpu_custom_call.1} parent=39 // pred_check_branch
        %557 = sbr.rel (%p555) target = $region44
      $region43: #{tpu_custom_call.1} parent=39 // pred_region
        _
      $region44: #{tpu_custom_call.1} parent=39 // pred_fallthru
        _
    $region40: #{tpu_custom_call.1} parent=5 // pred_fallthru
      _
    %p558 = scmp.le.s32.totalorder 2, %s11
    // Predicated region
    $region45: #{tpu_custom_call.1} parent=5 // pred_check
      %p559 = pneg %p558
    $region46: #{tpu_custom_call.1} parent=5 // pred_check_branch
      %561 = sbr.rel (%p559) target = $region48
    $region47: #{tpu_custom_call.1} parent=5 // pred_region
      %s562 = ssub.s32 %s11, 2
      // Predicated region
      $region49: #{tpu_custom_call.1} parent=47 // pred_check
        %p563 = pneg %p150
      $region50: #{tpu_custom_call.1} parent=47 // pred_check_branch
        %565 = sbr.rel (%p563) target = $region52
      $region51: #{tpu_custom_call.1} parent=47 // pred_region
        %p566 = scmp.lt.s32.totalorder %s17, 1
        %s567 = scalar_select %p566, %s17, 1
        %s568 = smul.addr %s567, 8
        %s569 = smul.addr %s568, 8
        %s570 = scalar_lea.vmem %s5, %s569
      $region52: #{tpu_custom_call.1} parent=47 // pred_fallthru
        _
    $region48: #{tpu_custom_call.1} parent=5 // pred_fallthru
      _
  $region6: #{tpu_custom_call.1} parent=0 // loop_footer
    %s15 = sadd.s32 1, %s11
  $region7: #{tpu_custom_call.1} parent=0 // loop_footer_branch
    %10 = sbr.rel target = $region3
  $region8: #{tpu_custom_call.1} parent=0 // loop_exit
    _

</llo_original>
